<compile_context>
chip_gen: v6e
topology: v6e:2x2x1
jax: 0.10.0
libtpu: 0.0.40
codegen_flags: <defaults>
</compile_context>

<pallas_src>
import jax
import jax.numpy as jnp
from jax.experimental import pallas as pl
from jax.experimental.pallas import tpu as pltpu


def sandwich_kernel(x_ref, r_ref, w1a_ref, w1b_ref, w2_ref, o_ref):
    # x_ref : (9, TP)  -> [albedo(3) | spec(3) | timefeature(3)], pixels on lanes
    # r_ref : (6, TP)  -> rays
    # w1a_ref: (6, 6)  first conv weight acting on [spec | timefeature]
    # w1b_ref: (6, 6)  first conv weight acting on rays
    # w2_ref : (3, 6)  second conv weight
    # o_ref : (3, TP)
    albedo = x_ref[0:3, :].astype(jnp.float32)        # (3, TP)
    spec_time = x_ref[3:9, :]                          # (6, TP)
    rays = r_ref[...]                                  # (6, TP)

    # First 1x1 conv, concat eliminated: W1 @ [spec_time; rays]
    h = (jnp.dot(w1a_ref[...], spec_time, preferred_element_type=jnp.float32)
         + jnp.dot(w1b_ref[...], rays, preferred_element_type=jnp.float32))
    h = jnp.maximum(h, 0.0)                            # ReLU

    # Second 1x1 conv
    y = jnp.dot(w2_ref[...], h, preferred_element_type=jnp.float32)   # (3, TP)

    o_ref[...] = jnp.clip(albedo + y, 0.0, 1.0).astype(o_ref.dtype)


def sandwichnoact_forward(x_nchw, rays_nchw, w1_conv, w2_conv, *, tile_pixels=32768):
    """x_nchw: (N, 9, H, W), rays_nchw: (N, 6, H, W)
    w1_conv: (6, 12, 1, 1), w2_conv: (3, 6, 1, 1)  (Conv2d weights, bias=False)
    Returns (N, 3, H, W)."""
    N, Cx, H, W = x_nchw.shape
    _, Cr, _, _ = rays_nchw.shape
    assert Cx == 9 and Cr == 6
    HW = H * W

    # Free reshapes (contiguous): NCHW -> (N, C, HW); pixels end up on lanes.
    x3 = x_nchw.reshape(N, Cx, HW)
    r3 = rays_nchw.reshape(N, Cr, HW)

    # 1x1 conv weights (out, in, 1, 1) -> (out, in) matmul form, split so the
    # kernel never concatenates on the channel axis.
    w1 = w1_conv.reshape(6, 12)
    w1a = w1[:, 0:6]        # acts on [spec | timefeature]
    w1b = w1[:, 6:12]       # acts on rays
    w2 = w2_conv.reshape(3, 6)

    # Tile: lane dim must be a multiple of 128 or the full extent.
    tile_pixels = max(128, (tile_pixels // 128) * 128)
    tp = HW if HW <= tile_pixels else tile_pixels
    grid = (N, pl.cdiv(HW, tp))

    out3 = pl.pallas_call(
        sandwich_kernel,
        out_shape=jax.ShapeDtypeStruct((N, 3, HW), x_nchw.dtype),
        grid_spec=pltpu.PrefetchScalarGridSpec(
            num_scalar_prefetch=0,
            grid=grid,
            in_specs=[
                pl.BlockSpec((None, Cx, tp), lambda n, i: (n, 0, i)),
                pl.BlockSpec((None, Cr, tp), lambda n, i: (n, 0, i)),
                # Weights: constant block index -> DMA'd once, kept resident.
                pl.BlockSpec((6, 6), lambda n, i: (0, 0)),
                pl.BlockSpec((6, 6), lambda n, i: (0, 0)),
                pl.BlockSpec((3, 6), lambda n, i: (0, 0)),
            ],
            out_specs=pl.BlockSpec((None, 3, tp), lambda n, i: (n, 0, i)),
        ),
        compiler_params=pltpu.CompilerParams(
            dimension_semantics=("parallel", "parallel")),
    )(x3, r3, w1a, w1b, w2)

    return out3.reshape(N, 3, H, W)


def sandwichnoact_reference(x_nchw, rays_nchw, w1_conv, w2_conv):
    """Pure-JAX reference matching the PyTorch forward exactly."""
    albedo = x_nchw[:, 0:3]
    spec = x_nchw[:, 3:6]
    timefeature = x_nchw[:, 6:9]
    specular = jnp.concatenate([spec, timefeature, rays_nchw], axis=1)  # (N,12,H,W)
    w1 = w1_conv.reshape(6, 12)
    w2 = w2_conv.reshape(3, 6)
    h = jnp.einsum("oc,nchw->nohw", w1, specular)
    h = jnp.maximum(h, 0.0)
    y = jnp.einsum("oc,nchw->nohw", w2, h)
    return jnp.clip(albedo + y, 0.0, 1.0)


if __name__ == "__main__":
    key = jax.random.PRNGKey(0)
    k_x, k_r, k_w1, k_w2 = jax.random.split(key, 4)

    N, H, W = 2, 32, 32
    # input has 9 channels (albedo/spec/timefeature, 3 each); rays has 6 channels
    x = jax.random.uniform(k_x, (N, 9, H, W), jnp.float32, minval=-1.0, maxval=2.0)
    rays = jax.random.uniform(k_r, (N, 6, H, W), jnp.float32, minval=-1.0, maxval=1.0)

    # Deterministic parameter init (shapes from nn.Conv2d(12,6,1)/(6,3,1), bias=False)
    w1 = jax.random.normal(k_w1, (6, 12, 1, 1), jnp.float32) * 0.2
    w2 = jax.random.normal(k_w2, (3, 6, 1, 1), jnp.float32) * 0.2

    out = sandwichnoact_forward(x, rays, w1, w2)
    out = jax.block_until_ready(out)

    ref = sandwichnoact_reference(x, rays, w1, w2)
    assert out.shape == (N, 3, H, W)
    assert jnp.allclose(out, ref, atol=1e-5, rtol=1e-5), "mismatch vs reference"

    print("KERNEL_OK")
</pallas_src>

<mosaic_0001>
module attributes {stable_mosaic.version = 11 : i64} {
  func.func @sandwich_kernel(%arg0: i32, %arg1: i32, %arg2: memref<1x9x1024xf32, #tpu.memory_space<vmem>>, %arg3: memref<1x6x1024xf32, #tpu.memory_space<vmem>>, %arg4: memref<6x6xf32, #tpu.memory_space<vmem>>, %arg5: memref<6x6xf32, #tpu.memory_space<vmem>>, %arg6: memref<3x6xf32, #tpu.memory_space<vmem>>, %arg7: memref<1x3x1024xf32, #tpu.memory_space<vmem>>) attributes {dimension_semantics = [#tpu.dimension_semantics<parallel>, #tpu.dimension_semantics<parallel>], iteration_bounds = array<i64: 2, 1>, scalar_prefetch = 0 : i64, scratch_operands = 0 : i64, tpu.core_type = #tpu.core_type<tc>, window_params = [{transform_indices = @transform_0, window_bounds = array<i64: 1, 9, 1024>}, {transform_indices = @transform_1, window_bounds = array<i64: 1, 6, 1024>}, {pipeline_mode = #tpu.pipeline_mode<synchronous>, transform_indices = @transform_2, window_bounds = array<i64: 6, 6>}, {pipeline_mode = #tpu.pipeline_mode<synchronous>, transform_indices = @transform_3, window_bounds = array<i64: 6, 6>}, {pipeline_mode = #tpu.pipeline_mode<synchronous>, transform_indices = @transform_4, window_bounds = array<i64: 3, 6>}, {transform_indices = @transform_5, window_bounds = array<i64: 1, 3, 1024>}]} {
    %c0 = arith.constant 0 : index
    %c0_0 = arith.constant 0 : index
    %c0_1 = arith.constant 0 : index
    %0 = vector.load %arg2[%c0, %c0_0, %c0_1] : memref<1x9x1024xf32, #tpu.memory_space<vmem>>, vector<1x3x1024xf32>
    %1 = vector.shape_cast %0 : vector<1x3x1024xf32> to vector<3x1024xf32>
    %c0_2 = arith.constant 0 : index
    %c3 = arith.constant 3 : index
    %c0_3 = arith.constant 0 : index
    %2 = vector.load %arg2[%c0_2, %c3, %c0_3] : memref<1x9x1024xf32, #tpu.memory_space<vmem>>, vector<1x6x1024xf32>
    %3 = vector.shape_cast %2 : vector<1x6x1024xf32> to vector<6x1024xf32>
    %c0_4 = arith.constant 0 : index
    %c0_5 = arith.constant 0 : index
    %c0_6 = arith.constant 0 : index
    %4 = vector.load %arg3[%c0_4, %c0_5, %c0_6] : memref<1x6x1024xf32, #tpu.memory_space<vmem>>, vector<1x6x1024xf32>
    %5 = vector.shape_cast %4 : vector<1x6x1024xf32> to vector<6x1024xf32>
    %c0_7 = arith.constant 0 : index
    %c0_8 = arith.constant 0 : index
    %6 = vector.load %arg4[%c0_7, %c0_8] : memref<6x6xf32, #tpu.memory_space<vmem>>, vector<6x6xf32>
    %cst = arith.constant dense<0.000000e+00> : vector<6x1024xf32>
    %7 = tpu.matmul %6, %3, %cst {dimension_numbers = #tpu.dot_dimension_numbers<[1], [0], [0], [1], [0, 0, 1, 1], [], []>} : vector<6x6xf32>, vector<6x1024xf32>, vector<6x1024xf32> -> vector<6x1024xf32>
    %c0_9 = arith.constant 0 : index
    %c0_10 = arith.constant 0 : index
    %8 = vector.load %arg5[%c0_9, %c0_10] : memref<6x6xf32, #tpu.memory_space<vmem>>, vector<6x6xf32>
    %cst_11 = arith.constant dense<0.000000e+00> : vector<6x1024xf32>
    %9 = tpu.matmul %8, %5, %cst_11 {dimension_numbers = #tpu.dot_dimension_numbers<[1], [0], [0], [1], [0, 0, 1, 1], [], []>} : vector<6x6xf32>, vector<6x1024xf32>, vector<6x1024xf32> -> vector<6x1024xf32>
    %10 = arith.addf %7, %9 : vector<6x1024xf32>
    %cst_12 = arith.constant 0.000000e+00 : f32
    %11 = vector.broadcast %cst_12 : f32 to vector<6x1024xf32>
    %12 = arith.maximumf %10, %11 : vector<6x1024xf32>
    %c0_13 = arith.constant 0 : index
    %c0_14 = arith.constant 0 : index
    %13 = vector.load %arg6[%c0_13, %c0_14] : memref<3x6xf32, #tpu.memory_space<vmem>>, vector<3x6xf32>
    %cst_15 = arith.constant dense<0.000000e+00> : vector<3x1024xf32>
    %14 = tpu.matmul %13, %12, %cst_15 {dimension_numbers = #tpu.dot_dimension_numbers<[1], [0], [0], [1], [0, 0, 1, 1], [], []>} : vector<3x6xf32>, vector<6x1024xf32>, vector<3x1024xf32> -> vector<3x1024xf32>
    %15 = arith.addf %1, %14 : vector<3x1024xf32>
    %cst_16 = arith.constant 0.000000e+00 : f32
    %cst_17 = arith.constant 1.000000e+00 : f32
    %16 = vector.broadcast %cst_16 : f32 to vector<3x1024xf32>
    %17 = arith.maximumf %16, %15 : vector<3x1024xf32>
    %18 = vector.broadcast %cst_17 : f32 to vector<3x1024xf32>
    %19 = arith.minimumf %18, %17 : vector<3x1024xf32>
    %c0_18 = arith.constant 0 : index
    %c0_19 = arith.constant 0 : index
    %c0_20 = arith.constant 0 : index
    %20 = vector.load %arg7[%c0_18, %c0_19, %c0_20] : memref<1x3x1024xf32, #tpu.memory_space<vmem>>, vector<1x3x1024xf32>
    %21 = vector.shape_cast %20 : vector<1x3x1024xf32> to vector<3x1024xf32>
    %22 = vector.shape_cast %19 : vector<3x1024xf32> to vector<1x3x1024xf32>
    tpu.vector_store %arg7[%c0_18, %c0_19, %c0_20], %22 {strides = array<i32>} : memref<1x3x1024xf32, #tpu.memory_space<vmem>>, vector<1x3x1024xf32>,
    return
  }
  func.func @transform_0(%arg0: i32, %arg1: i32) -> (i32, i32, i32) {
    %c0_i32 = arith.constant 0 : i32
    %c0_i32_0 = arith.constant 0 : i32
    return %arg0, %c0_i32, %arg1 : i32, i32, i32
  }
  func.func @transform_1(%arg0: i32, %arg1: i32) -> (i32, i32, i32) {
    %c0_i32 = arith.constant 0 : i32
    %c0_i32_0 = arith.constant 0 : i32
    return %arg0, %c0_i32, %arg1 : i32, i32, i32
  }
  func.func @transform_2(%arg0: i32, %arg1: i32) -> (i32, i32) {
    %c0_i32 = arith.constant 0 : i32
    %c0_i32_0 = arith.constant 0 : i32
    %c0_i32_1 = arith.constant 0 : i32
    return %c0_i32, %c0_i32_0 : i32, i32
  }
  func.func @transform_3(%arg0: i32, %arg1: i32) -> (i32, i32) {
    %c0_i32 = arith.constant 0 : i32
    %c0_i32_0 = arith.constant 0 : i32
    %c0_i32_1 = arith.constant 0 : i32
    return %c0_i32, %c0_i32_0 : i32, i32
  }
  func.func @transform_4(%arg0: i32, %arg1: i32) -> (i32, i32) {
    %c0_i32 = arith.constant 0 : i32
    %c0_i32_0 = arith.constant 0 : i32
    %c0_i32_1 = arith.constant 0 : i32
    return %c0_i32, %c0_i32_0 : i32, i32
  }
  func.func @transform_5(%arg0: i32, %arg1: i32) -> (i32, i32, i32) {
    %c0_i32 = arith.constant 0 : i32
    %c0_i32_0 = arith.constant 0 : i32
    return %arg0, %c0_i32, %arg1 : i32, i32, i32
  }
}

</mosaic_0001>

<llo_original>
// kernel: tpu_custom_call.1
$region0: #{tpu_custom_call.1}
  #allocation0 [shape = 'u32[]', space=smem, size = 0x4, offset = 0x4, fixed_abs, tag = 'smem constant byte address 0x4 - core index']
  #allocation1 [shape = 'u32[144,128]{1,0:T(1,128)}', space=vmem, size = 0x12000, scoped, tag = 'internal scratch']
  %s0 = inlined_call_operand.vmem [shape: f32[2,9,1024], index: 0, kind: input, shape index: {}]
  %s1 = inlined_call_operand.vmem [shape: f32[2,6,1024], index: 1, kind: input, shape index: {}]
  %s2 = inlined_call_operand.vmem [shape: f32[6,6], index: 2, kind: input, shape index: {}]
  %s3 = inlined_call_operand.vmem [shape: f32[6,6], index: 3, kind: input, shape index: {}]
  %s4 = inlined_call_operand.vmem [shape: f32[3,6], index: 4, kind: input, shape index: {}]
  %s5 = inlined_call_operand.vmem [shape: f32[2,3,1024], index: 5, kind: output, shape index: {}]
  %s6 = sld [smem:[#allocation0]]
  $region53: #{tpu_custom_call.1} parent=0
    _
  %s8 = ssub.s32 1, %s6
  %s9 = scalar_select 0, %s8, %s6
  loop: start=0, step=1, limit=4
  $region2: #{tpu_custom_call.1} parent=0 // loop_pre_header
    _
  $region3: #{tpu_custom_call.1} parent=0 // loop_header
    %s11 = sphi 0, %s15
    %p12 = scmp.ge.s32.totalorder %s11, 4
    %s18 = sphi 0, %s30
    %s19 = sphi 0, %s26
    %s20 = sphi 0, %s18
    %s21 = sphi 0, %s19
    %s22 = sphi 0, %s20
    %s23 = sphi 0, %s21
    %s35 = sphi 0, %s37
    %s38 = sphi 0, %s35
    %s39 = sphi 0, %s38
    %s55 = sphi 0, %s39
    %s63 = sphi 0, %s65
    %s66 = sphi 0, %s63
    %s67 = sphi 0, %s66
    %s83 = sphi 0, %s67
    %s87 = sphi 0, %s87
    %s89 = sphi 0, %s87
    %s90 = sphi 0, %s89
    %s104 = sphi 0, %s90
    %s108 = sphi 0, %s108
    %s110 = sphi 0, %s108
    %s111 = sphi 0, %s110
    %s125 = sphi 0, %s111
    %s129 = sphi 0, %s129
    %s131 = sphi 0, %s129
    %s132 = sphi 0, %s131
    %s146 = sphi 0, %s132
    %s154 = sphi 0, %s156
    %s157 = sphi 0, %s154
    %s158 = sphi 0, %s157
    %s174 = sphi 0, %s158
  $region4: #{tpu_custom_call.1} parent=0 // loop_header_branch
    %14 = sbr.rel (%p12) target = $region8
  $region5: #{tpu_custom_call.1} parent=0 // loop_body
    %s16 = ssub.s32 %s11, 1
    %s17 = ssub.s32 %s11, 2
    %s24 = sadd.s32 1, %s19
    %p25 = scmp.ge.s32.totalorder %s24, 1
    %s26 = scalar_select %p25, 0, %s24
    %s27 = sadd.s32 1, %s18
    %s28 = scalar_select %p25, %s27, %s18
    %p29 = scmp.ge.s32.totalorder %s28, 2
    %s30 = scalar_select %p29, 0, %s28
    %s31 = ssub.s32 %s18, %s30
    %s32 = ssub.s32 %s19, %s26
    %s33 = sor.u32 %s31, %s32
    %p34 = scmp.eq.s32.totalorder %s33, 0
    %s36 = sadd.s32 %s35, 1
    %s37 = scalar_select %p34, %s35, %s36
    %p40 = pneg %p34
    %p41 = scmp.eq.s32.totalorder %s11, 1
    %p42 = por %p40, %p41
    %p43 = scmp.ne.s32.totalorder %s35, %s38
    %p44 = scmp.eq.s32.totalorder %s11, 0
    %p45 = por %p43, %p44
    %p46 = scmp.ne.s32.totalorder %s35, %s38
    %p47 = scmp.eq.s32.totalorder %s16, 1
    %p48 = por %p46, %p47
    %p49 = scmp.ne.s32.totalorder %s38, %s39
    %p50 = scmp.eq.s32.totalorder %s16, 0
    %p51 = por %p49, %p50
    %p52 = scmp.ne.s32.totalorder %s38, %s39
    %p53 = scmp.eq.s32.totalorder %s17, 1
    %p54 = por %p52, %p53
    %p56 = scmp.ne.s32.totalorder %s39, %s55
    %p57 = scmp.eq.s32.totalorder %s17, 0
    %p58 = por %p56, %p57
    %s59 = ssub.s32 %s18, %s30
    %s60 = ssub.s32 %s19, %s26
    %s61 = sor.u32 %s59, %s60
    %p62 = scmp.eq.s32.totalorder %s61, 0
    %s64 = sadd.s32 %s63, 1
    %s65 = scalar_select %p62, %s63, %s64
    %p68 = pneg %p62
    %p69 = scmp.eq.s32.totalorder %s11, 1
    %p70 = por %p68, %p69
    %p71 = scmp.ne.s32.totalorder %s63, %s66
    %p72 = scmp.eq.s32.totalorder %s11, 0
    %p73 = por %p71, %p72
    %p74 = scmp.ne.s32.totalorder %s63, %s66
    %p75 = scmp.eq.s32.totalorder %s16, 1
    %p76 = por %p74, %p75
    %p77 = scmp.ne.s32.totalorder %s66, %s67
    %p78 = scmp.eq.s32.totalorder %s16, 0
    %p79 = por %p77, %p78
    %p80 = scmp.ne.s32.totalorder %s66, %s67
    %p81 = scmp.eq.s32.totalorder %s17, 1
    %p82 = por %p80, %p81
    %p84 = scmp.ne.s32.totalorder %s67, %s83
    %p85 = scmp.eq.s32.totalorder %s17, 0
    %p86 = por %p84, %p85
    %s88 = sadd.s32 %s87, 1
    %p91 = scmp.eq.s32.totalorder %s11, 1
    %p92 = scmp.ne.s32.totalorder %s87, %s89
    %p93 = scmp.eq.s32.totalorder %s11, 0
    %p94 = por %p92, %p93
    %p95 = scmp.ne.s32.totalorder %s87, %s89
    %p96 = scmp.eq.s32.totalorder %s16, 1
    %p97 = por %p95, %p96
    %p98 = scmp.ne.s32.totalorder %s89, %s90
    %p99 = scmp.eq.s32.totalorder %s16, 0
    %p100 = por %p98, %p99
    %p101 = scmp.ne.s32.totalorder %s89, %s90
    %p102 = scmp.eq.s32.totalorder %s17, 1
    %p103 = por %p101, %p102
    %p105 = scmp.ne.s32.totalorder %s90, %s104
    %p106 = scmp.eq.s32.totalorder %s17, 0
    %p107 = por %p105, %p106
    %s109 = sadd.s32 %s108, 1
    %p112 = scmp.eq.s32.totalorder %s11, 1
    %p113 = scmp.ne.s32.totalorder %s108, %s110
    %p114 = scmp.eq.s32.totalorder %s11, 0
    %p115 = por %p113, %p114
    %p116 = scmp.ne.s32.totalorder %s108, %s110
    %p117 = scmp.eq.s32.totalorder %s16, 1
    %p118 = por %p116, %p117
    %p119 = scmp.ne.s32.totalorder %s110, %s111
    %p120 = scmp.eq.s32.totalorder %s16, 0
    %p121 = por %p119, %p120
    %p122 = scmp.ne.s32.totalorder %s110, %s111
    %p123 = scmp.eq.s32.totalorder %s17, 1
    %p124 = por %p122, %p123
    %p126 = scmp.ne.s32.totalorder %s111, %s125
    %p127 = scmp.eq.s32.totalorder %s17, 0
    %p128 = por %p126, %p127
    %s130 = sadd.s32 %s129, 1
    %p133 = scmp.eq.s32.totalorder %s11, 1
    %p134 = scmp.ne.s32.totalorder %s129, %s131
    %p135 = scmp.eq.s32.totalorder %s11, 0
    %p136 = por %p134, %p135
    %p137 = scmp.ne.s32.totalorder %s129, %s131
    %p138 = scmp.eq.s32.totalorder %s16, 1
    %p139 = por %p137, %p138
    %p140 = scmp.ne.s32.totalorder %s131, %s132
    %p141 = scmp.eq.s32.totalorder %s16, 0
    %p142 = por %p140, %p141
    %p143 = scmp.ne.s32.totalorder %s131, %s132
    %p144 = scmp.eq.s32.totalorder %s17, 1
    %p145 = por %p143, %p144
    %p147 = scmp.ne.s32.totalorder %s132, %s146
    %p148 = scmp.eq.s32.totalorder %s17, 0
    %p149 = por %p147, %p148
    %s150 = ssub.s32 %s18, %s30
    %s151 = ssub.s32 %s19, %s26
    %s152 = sor.u32 %s150, %s151
    %p153 = scmp.eq.s32.totalorder %s152, 0
    %s155 = sadd.s32 %s154, 1
    %s156 = scalar_select %p153, %s154, %s155
    %p159 = pneg %p153
    %p160 = scmp.eq.s32.totalorder %s11, 1
    %p161 = por %p159, %p160
    %p162 = scmp.ne.s32.totalorder %s154, %s157
    %p163 = scmp.eq.s32.totalorder %s11, 0
    %p164 = por %p162, %p163
    %p165 = scmp.ne.s32.totalorder %s154, %s157
    %p166 = scmp.eq.s32.totalorder %s16, 1
    %p167 = por %p165, %p166
    %p168 = scmp.ne.s32.totalorder %s157, %s158
    %p169 = scmp.eq.s32.totalorder %s16, 0
    %p170 = por %p168, %p169
    %p171 = scmp.ne.s32.totalorder %s157, %s158
    %p172 = scmp.eq.s32.totalorder %s17, 1
    %p173 = por %p171, %p172
    %p175 = scmp.ne.s32.totalorder %s158, %s174
    %p176 = scmp.eq.s32.totalorder %s17, 0
    %p177 = por %p175, %p176
    %p178 = scmp.le.s32.totalorder 1, %s11
    %p179 = scmp.lt.s32.totalorder %s11, 3
    %p180 = pnand %p178, %p179
    %p181 = pneg %p180
    // Predicated region
    $region9: #{tpu_custom_call.1} parent=5 // pred_check
      _
    $region10: #{tpu_custom_call.1} parent=5 // pred_check_branch
      %183 = sbr.rel (%p180) target = $region12
    $region11: #{tpu_custom_call.1} parent=5 // pred_region
      %s184 = ssub.s32 %s11, 1
      // Predicated region
      $region13: #{tpu_custom_call.1} parent=11 // pred_check
        %p185 = pneg %p100
      $region14: #{tpu_custom_call.1} parent=11 // pred_check_branch
        %187 = sbr.rel (%p185) target = $region16
      $region15: #{tpu_custom_call.1} parent=11 // pred_region
        _
      $region16: #{tpu_custom_call.1} parent=11 // pred_fallthru
        _
      // Predicated region
      $region17: #{tpu_custom_call.1} parent=11 // pred_check
        %p188 = pneg %p121
      $region18: #{tpu_custom_call.1} parent=11 // pred_check_branch
        %190 = sbr.rel (%p188) target = $region20
      $region19: #{tpu_custom_call.1} parent=11 // pred_region
        _
      $region20: #{tpu_custom_call.1} parent=11 // pred_fallthru
        _
      // Predicated region
      $region21: #{tpu_custom_call.1} parent=11 // pred_check
        %p191 = pneg %p142
      $region22: #{tpu_custom_call.1} parent=11 // pred_check_branch
        %193 = sbr.rel (%p191) target = $region24
      $region23: #{tpu_custom_call.1} parent=11 // pred_region
        _
      $region24: #{tpu_custom_call.1} parent=11 // pred_fallthru
        _
    $region12: #{tpu_custom_call.1} parent=5 // pred_fallthru
      _
    %p194 = scmp.lt.s32.totalorder %s11, 2
    // Predicated region
    $region25: #{tpu_custom_call.1} parent=5 // pred_check
      %p195 = pneg %p194
    $region26: #{tpu_custom_call.1} parent=5 // pred_check_branch
      %197 = sbr.rel (%p195) target = $region28
    $region27: #{tpu_custom_call.1} parent=5 // pred_region
      // Predicated region
      $region29: #{tpu_custom_call.1} parent=27 // pred_check
        %p198 = pneg %p45
      $region30: #{tpu_custom_call.1} parent=27 // pred_check_branch
        %200 = sbr.rel (%p198) target = $region32
      $region31: #{tpu_custom_call.1} parent=27 // pred_region
        %s201 = smul.u32 8, %s19
        %p202 = scmp.lt.s32.totalorder %s18, 1
        %s203 = scalar_select %p202, %s18, 1
        %p204 = scmp.lt.s32.totalorder %s201, 7
        %s205 = scalar_select %p204, %s201, 7
        %s206 = smul.addr %s203, 16
        %s207 = sadd.s32 %s205, %s206
        %s208 = smul.addr %s207, 8
        %s209 = scalar_lea.vmem %s0, %s208
        %s210 = smul.u32 8, %s19
      $region32: #{tpu_custom_call.1} parent=27 // pred_fallthru
        _
      // Predicated region
      $region33: #{tpu_custom_call.1} parent=27 // pred_check
        %p211 = pneg %p73
      $region34: #{tpu_custom_call.1} parent=27 // pred_check_branch
        %213 = sbr.rel (%p211) target = $region36
      $region35: #{tpu_custom_call.1} parent=27 // pred_region
        %s214 = smul.u32 8, %s19
        %p215 = scmp.lt.s32.totalorder %s18, 1
        %s216 = scalar_select %p215, %s18, 1
        %p217 = scmp.lt.s32.totalorder %s214, 7
        %s218 = scalar_select %p217, %s214, 7
        %s219 = smul.addr %s216, 8
        %s220 = sadd.s32 %s218, %s219
        %s221 = smul.addr %s220, 8
        %s222 = scalar_lea.vmem %s1, %s221
        %s223 = smul.u32 8, %s19
      $region36: #{tpu_custom_call.1} parent=27 // pred_fallthru
        _
    $region28: #{tpu_custom_call.1} parent=5 // pred_fallthru
      _
    %p224 = scmp.le.s32.totalorder 1, %s11
    %p225 = scmp.lt.s32.totalorder %s11, 3
    %p226 = pnand %p224, %p225
    %p227 = pneg %p226
    // Predicated region
    $region37: #{tpu_custom_call.1} parent=5 // pred_check
      _
    $region38: #{tpu_custom_call.1} parent=5 // pred_check_branch
      %229 = sbr.rel (%p226) target = $region40
    $region39: #{tpu_custom_call.1} parent=5 // pred_region
      %s230 = ssub.s32 %s11, 1
      %s231 = smul.u32 8, %s21
      %p232 = scmp.lt.s32.totalorder %s20, 1
      %s233 = scalar_select %p232, %s20, 1
      %p234 = scmp.lt.s32.totalorder %s231, 7
      %s235 = scalar_select %p234, %s231, 7
      %s236 = smul.addr %s233, 16
      %s237 = sadd.s32 %s235, %s236
      %s238 = smul.addr %s237, 8
      %s239 = scalar_lea.vmem %s0, %s238
      %p240 = pneg %p51
      %p241 = pneg %p48
      %s242 = smul.u32 8, %s21
      %p243 = scmp.lt.s32.totalorder %s20, 1
      %s244 = scalar_select %p243, %s20, 1
      %p245 = scmp.lt.s32.totalorder %s242, 7
      %s246 = scalar_select %p245, %s242, 7
      %s247 = smul.addr %s244, 8
      %s248 = sadd.s32 %s246, %s247
      %s249 = smul.addr %s248, 8
      %s250 = scalar_lea.vmem %s1, %s249
      %p251 = pneg %p79
      %p252 = pneg %p76
      %p253 = pneg %p100
      %p254 = pneg %p97
      %p255 = pneg %p121
      %p256 = pneg %p118
      %p257 = pneg %p142
      %p258 = pneg %p139
      %p259 = pneg %p170
      %p260 = pneg %p167
      %s261 = smul.u32 8, %s21
      %p262 = scmp.lt.s32.totalorder %s20, 1
      %s263 = scalar_select %p262, %s20, 1
      %p264 = scmp.lt.s32.totalorder %s261, 7
      %s265 = scalar_select %p264, %s261, 7
      %s266 = smul.addr %s263, 8
      %s267 = sadd.s32 %s265, %s266
      %s268 = smul.addr %s267, 4
      %s269 = scalar_lea.vmem %s5, %s268
      %s270 = smul.u32 8, %s21
      %p271 = scmp.lt.s32.totalorder %s20, 1
      %s272 = scalar_select %p271, %s20, 1
      %p273 = scmp.lt.s32.totalorder %s270, 7
      %s274 = scalar_select %p273, %s270, 7
      %s275 = smul.addr %s272, 16
      %s276 = sadd.s32 %s274, %s275
      %s277 = smul.addr %s276, 8
      %s278 = scalar_lea.vmem %s0, %s277
      %s279 = smul.u32 8, %s21
      %s280 = smul.u32 8, %s21
      %p281 = scmp.lt.s32.totalorder %s20, 1
      %s282 = scalar_select %p281, %s20, 1
      %p283 = scmp.lt.s32.totalorder %s280, 7
      %s284 = scalar_select %p283, %s280, 7
      %s285 = smul.addr %s282, 8
      %s286 = sadd.s32 %s284, %s285
      %s287 = smul.addr %s286, 8
      %s288 = scalar_lea.vmem %s1, %s287
      %s289 = smul.u32 8, %s21
      %s290 = smul.u32 8, %s21
      %p291 = scmp.lt.s32.totalorder %s20, 1
      %s292 = scalar_select %p291, %s20, 1
      %p293 = scmp.lt.s32.totalorder %s290, 7
      %s294 = scalar_select %p293, %s290, 7
      %s295 = smul.addr %s292, 8
      %s296 = sadd.s32 %s294, %s295
      %s297 = smul.addr %s296, 4
      %s298 = scalar_lea.vmem %s5, %s297
      %s299 = smul.u32 8, %s21
      %v300 = vld [vmem:[%s278] sm:$0x7]
      %v301 = vld [vmem:[%s278 + $0x8] sm:$0x7]
      %v302 = vld [vmem:[%s278 + $0x10] sm:$0x7]
      %v303 = vld [vmem:[%s278 + $0x18] sm:$0x7]
      %v304 = vld [vmem:[%s278 + $0x20] sm:$0x7]
      %v305 = vld [vmem:[%s278 + $0x28] sm:$0x7]
      %v306 = vld [vmem:[%s278 + $0x30] sm:$0x7]
      %v307 = vld [vmem:[%s278 + $0x38] sm:$0x7]
      %v308 = vld [vmem:[%s278] sm:$0xf8]
      %v309 = vld [vmem:[%s278 + $0x8] sm:$0xf8]
      %v310 = vld [vmem:[%s278 + $0x10] sm:$0xf8]
      %v311 = vld [vmem:[%s278 + $0x18] sm:$0xf8]
      %v312 = vld [vmem:[%s278 + $0x20] sm:$0xf8]
      %v313 = vld [vmem:[%s278 + $0x28] sm:$0xf8]
      %v314 = vld [vmem:[%s278 + $0x30] sm:$0xf8]
      %v315 = vld [vmem:[%s278 + $0x38] sm:$0xf8]
      %v316 = vld [vmem:[%s278 + $0x40] sm:$0x1]
      %v317 = vld [vmem:[%s278 + $0x48] sm:$0x1]
      %v318 = vld [vmem:[%s278 + $0x50] sm:$0x1]
      %v319 = vld [vmem:[%s278 + $0x58] sm:$0x1]
      %v320 = vld [vmem:[%s278 + $0x60] sm:$0x1]
      %v321 = vld [vmem:[%s278 + $0x68] sm:$0x1]
      %v322 = vld [vmem:[%s278 + $0x70] sm:$0x1]
      %v323 = vld [vmem:[%s278 + $0x78] sm:$0x1]
      %v324 = vld [vmem:[%s288] sm:$0x3f]
      %v325 = vld [vmem:[%s288 + $0x8] sm:$0x3f]
      %v326 = vld [vmem:[%s288 + $0x10] sm:$0x3f]
      %v327 = vld [vmem:[%s288 + $0x18] sm:$0x3f]
      %v328 = vld [vmem:[%s288 + $0x20] sm:$0x3f]
      %v329 = vld [vmem:[%s288 + $0x28] sm:$0x3f]
      %v330 = vld [vmem:[%s288 + $0x30] sm:$0x3f]
      %v331 = vld [vmem:[%s288 + $0x38] sm:$0x3f]
      %v332 = vld [vmem:[%s2] sm:$0x3f]
      %v333 = vld [vmem:[%s3] sm:$0x3f]
      %vm334 = vcmask 48128
      %v336 = vsel %vm334, %v333, 0
      %vm338 = vcmask 1045504
      %v340 = vsel %vm338, %v324, 0
      %v343 = vsel %vm338, %v325, 0
      %v346 = vsel %vm338, %v326, 0
      %v349 = vsel %vm338, %v327, 0
      %v352 = vsel %vm338, %v328, 0
      %v355 = vsel %vm338, %v329, 0
      %v358 = vsel %vm338, %v330, 0
      %v361 = vsel %vm338, %v331, 0
      %363 = vmatprep.subr.mxu0 0.0
      %364 = vmatpush1.msra.mxu0 0.0
      %365 = vmatprep.subr.mxu0 0.0
      %366 = vmatpush1.msra.mxu0 0.0
      %367 = vmatprep.subr.mxu0 0.0
      %368 = vmatpush1.msra.mxu0 0.0
      %369 = vmatprep.subr.mxu0 0.0
      %370 = vmatpush1.msra.mxu0 0.0
      %371 = vmatprep.subr.mxu0 0.0
      %372 = vmatpush1.msra.mxu0 0.0
      %373 = vmatprep.subr.mxu0 0.0
      %374 = vmatpush1.msra.mxu0 0.0
      %375 = vmatprep.subr.mxu0 0.0
      %376 = vmatpush1.msra.mxu0 0.0
      %377 = vmatprep.subr.mxu0 0.0
      %378 = vmatpush1.msra.mxu0 0.0
      %379 = vmatprep.subr.mxu0 0.0
      %380 = vmatpush1.msra.mxu0 0.0
      %381 = vmatprep.subr.mxu0 0.0
      %382 = vmatpush1.msra.mxu0 0.0
      %383 = vmatprep.subr.mxu0 0.0
      %384 = vmatpush1.msra.mxu0 0.0
      %385 = vmatprep.subr.mxu0 0.0
      %386 = vmatpush1.msra.mxu0 0.0
      %387 = vmatprep.subr.mxu0 0.0
      %388 = vmatpush1.msra.mxu0 0.0
      %389 = vmatprep.subr.mxu0 0.0
      %390 = vmatpush1.msra.mxu0 0.0
      %391 = vmatprep.subr.mxu0 0.0
      %392 = vmatpush1.msra.mxu0 0.0
      %393 = vmatprep.subr.mxu0 %v343
      %394 = vmatpush1.msra.mxu0 %v340
      %395 = vmatprep.subr.mxu0 0.0
      %396 = vmatpush2.msra.mxu0 0.0
      %397 = vmatprep.subr.mxu0 0.0
      %398 = vmatpush2.msra.mxu0 0.0
      %399 = vmatprep.subr.mxu0 0.0
      %400 = vmatpush2.msra.mxu0 0.0
      %401 = vmatprep.subr.mxu0 0.0
      %402 = vmatpush2.msra.mxu0 0.0
      %403 = vmatprep.subr.mxu0 0.0
      %404 = vmatpush2.msra.mxu0 0.0
      %405 = vmatprep.subr.mxu0 0.0
      %406 = vmatpush2.msra.mxu0 0.0
      %407 = vmatprep.subr.mxu0 0.0
      %408 = vmatpush2.msra.mxu0 0.0
      %409 = vmatprep.subr.mxu0 0.0
      %410 = vmatpush2.msra.mxu0 0.0
      %411 = vmatprep.subr.mxu0 0.0
      %412 = vmatpush2.msra.mxu0 0.0
      %413 = vmatprep.subr.mxu0 0.0
      %414 = vmatpush2.msra.mxu0 0.0
      %415 = vmatprep.subr.mxu0 0.0
      %416 = vmatpush2.msra.mxu0 0.0
      %417 = vmatprep.subr.mxu0 0.0
      %418 = vmatpush2.msra.mxu0 0.0
      %419 = vmatprep.subr.mxu0 0.0
      %420 = vmatpush2.msra.mxu0 0.0
      %421 = vmatprep.subr.mxu0 0.0
      %422 = vmatpush2.msra.mxu0 0.0
      %423 = vmatprep.subr.mxu0 0.0
      %424 = vmatpush2.msra.mxu0 0.0
      %425 = vmatprep.subr.mxu0 0.0
      %426 = vmatpush2.msra.mxu0 0.0
      %427 = vmatprep.mubr.f32.mxu0 0.0
      %428 = vmatmul.mubr.f32.gmra.mxu0 %v336
      %v429 = vpop.f32.mrf.mxu0
      %v430 = vadd.f32 0.0, %v429
      %v431 = vpop.f32.mrf.mxu0
      %v432 = vadd.f32 0.0, %v431
      %433 = vdwg.mxu0
      %434 = vmatprep.subr.mxu0 0.0
      %435 = vmatpush1.msra.mxu0 0.0
      %436 = vmatprep.subr.mxu0 0.0
      %437 = vmatpush1.msra.mxu0 0.0
      %438 = vmatprep.subr.mxu0 0.0
      %439 = vmatpush1.msra.mxu0 0.0
      %440 = vmatprep.subr.mxu0 0.0
      %441 = vmatpush1.msra.mxu0 0.0
      %442 = vmatprep.subr.mxu0 0.0
      %443 = vmatpush1.msra.mxu0 0.0
      %444 = vmatprep.subr.mxu0 0.0
      %445 = vmatpush1.msra.mxu0 0.0
      %446 = vmatprep.subr.mxu0 0.0
      %447 = vmatpush1.msra.mxu0 0.0
      %448 = vmatprep.subr.mxu0 0.0
      %449 = vmatpush1.msra.mxu0 0.0
      %450 = vmatprep.subr.mxu0 0.0
      %451 = vmatpush1.msra.mxu0 0.0
      %452 = vmatprep.subr.mxu0 0.0
      %453 = vmatpush1.msra.mxu0 0.0
      %454 = vmatprep.subr.mxu0 0.0
      %455 = vmatpush1.msra.mxu0 0.0
      %456 = vmatprep.subr.mxu0 0.0
      %457 = vmatpush1.msra.mxu0 0.0
      %458 = vmatprep.subr.mxu0 0.0
      %459 = vmatpush1.msra.mxu0 0.0
      %460 = vmatprep.subr.mxu0 0.0
      %461 = vmatpush1.msra.mxu0 0.0
      %462 = vmatprep.subr.mxu0 0.0
      %463 = vmatpush1.msra.mxu0 0.0
      %464 = vmatprep.subr.mxu0 %v349
      %465 = vmatpush1.msra.mxu0 %v346
      %466 = vmatprep.subr.mxu0 0.0
      %467 = vmatpush2.msra.mxu0 0.0
      %468 = vmatprep.subr.mxu0 0.0
      %469 = vmatpush2.msra.mxu0 0.0
      %470 = vmatprep.subr.mxu0 0.0
      %471 = vmatpush2.msra.mxu0 0.0
      %472 = vmatprep.subr.mxu0 0.0
      %473 = vmatpush2.msra.mxu0 0.0
      %474 = vmatprep.subr.mxu0 0.0
      %475 = vmatpush2.msra.mxu0 0.0
      %476 = vmatprep.subr.mxu0 0.0
      %477 = vmatpush2.msra.mxu0 0.0
      %478 = vmatprep.subr.mxu0 0.0
      %479 = vmatpush2.msra.mxu0 0.0
      %480 = vmatprep.subr.mxu0 0.0
      %481 = vmatpush2.msra.mxu0 0.0
      %482 = vmatprep.subr.mxu0 0.0
      %483 = vmatpush2.msra.mxu0 0.0
      %484 = vmatprep.subr.mxu0 0.0
      %485 = vmatpush2.msra.mxu0 0.0
      %486 = vmatprep.subr.mxu0 0.0
      %487 = vmatpush2.msra.mxu0 0.0
      %488 = vmatprep.subr.mxu0 0.0
      %489 = vmatpush2.msra.mxu0 0.0
      %490 = vmatprep.subr.mxu0 0.0
      %491 = vmatpush2.msra.mxu0 0.0
      %492 = vmatprep.subr.mxu0 0.0
      %493 = vmatpush2.msra.mxu0 0.0
      %494 = vmatprep.subr.mxu0 0.0
      %495 = vmatpush2.msra.mxu0 0.0
      %496 = vmatprep.subr.mxu0 0.0
      %497 = vmatpush2.msra.mxu0 0.0
      %498 = vmatprep.mubr.f32.mxu0 0.0
      %499 = vmatmul.mubr.f32.gmra.mxu0 %v336
      %v500 = vpop.f32.mrf.mxu0
      %v501 = vadd.f32 0.0, %v500
      %v502 = vpop.f32.mrf.mxu0
      %v503 = vadd.f32 0.0, %v502
      %504 = vdwg.mxu0
      %505 = vmatprep.subr.mxu0 0.0
      %506 = vmatpush1.msra.mxu0 0.0
      %507 = vmatprep.subr.mxu0 0.0
      %508 = vmatpush1.msra.mxu0 0.0
      %509 = vmatprep.subr.mxu0 0.0
      %510 = vmatpush1.msra.mxu0 0.0
      %511 = vmatprep.subr.mxu0 0.0
      %512 = vmatpush1.msra.mxu0 0.0
      %513 = vmatprep.subr.mxu0 0.0
      %514 = vmatpush1.msra.mxu0 0.0
      %515 = vmatprep.subr.mxu0 0.0
      %516 = vmatpush1.msra.mxu0 0.0
      %517 = vmatprep.subr.mxu0 0.0
      %518 = vmatpush1.msra.mxu0 0.0
      %519 = vmatprep.subr.mxu0 0.0
      %520 = vmatpush1.msra.mxu0 0.0
      %521 = vmatprep.subr.mxu0 0.0
      %522 = vmatpush1.msra.mxu0 0.0
      %523 = vmatprep.subr.mxu0 0.0
      %524 = vmatpush1.msra.mxu0 0.0
      %525 = vmatprep.subr.mxu0 0.0
      %526 = vmatpush1.msra.mxu0 0.0
      %527 = vmatprep.subr.mxu0 0.0
      %528 = vmatpush1.msra.mxu0 0.0
      %529 = vmatprep.subr.mxu0 0.0
      %530 = vmatpush1.msra.mxu0 0.0
      %531 = vmatprep.subr.mxu0 0.0
      %532 = vmatpush1.msra.mxu0 0.0
      %533 = vmatprep.subr.mxu0 0.0
      %534 = vmatpush1.msra.mxu0 0.0
      %535 = vmatprep.subr.mxu0 %v355
      %536 = vmatpush1.msra.mxu0 %v352
      %537 = vmatprep.subr.mxu0 0.0
      %538 = vmatpush2.msra.mxu0 0.0
      %539 = vmatprep.subr.mxu0 0.0
      %540 = vmatpush2.msra.mxu0 0.0
      %541 = vmatprep.subr.mxu0 0.0
      %542 = vmatpush2.msra.mxu0 0.0
      %543 = vmatprep.subr.mxu0 0.0
      %544 = vmatpush2.msra.mxu0 0.0
      %545 = vmatprep.subr.mxu0 0.0
      %546 = vmatpush2.msra.mxu0 0.0
      %547 = vmatprep.subr.mxu0 0.0
      %548 = vmatpush2.msra.mxu0 0.0
      %549 = vmatprep.subr.mxu0 0.0
      %550 = vmatpush2.msra.mxu0 0.0
      %551 = vmatprep.subr.mxu0 0.0
      %552 = vmatpush2.msra.mxu0 0.0
      %553 = vmatprep.subr.mxu0 0.0
      %554 = vmatpush2.msra.mxu0 0.0
      %555 = vmatprep.subr.mxu0 0.0
      %556 = vmatpush2.msra.mxu0 0.0
      %557 = vmatprep.subr.mxu0 0.0
      %558 = vmatpush2.msra.mxu0 0.0
      %559 = vmatprep.subr.mxu0 0.0
      %560 = vmatpush2.msra.mxu0 0.0
      %561 = vmatprep.subr.mxu0 0.0
      %562 = vmatpush2.msra.mxu0 0.0
      %563 = vmatprep.subr.mxu0 0.0
      %564 = vmatpush2.msra.mxu0 0.0
      %565 = vmatprep.subr.mxu0 0.0
      %566 = vmatpush2.msra.mxu0 0.0
      %567 = vmatprep.subr.mxu0 0.0
      %568 = vmatpush2.msra.mxu0 0.0
      %569 = vmatprep.mubr.f32.mxu0 0.0
      %570 = vmatmul.mubr.f32.gmra.mxu0 %v336
      %v571 = vpop.f32.mrf.mxu0
      %v572 = vadd.f32 0.0, %v571
      %v573 = vpop.f32.mrf.mxu0
      %v574 = vadd.f32 0.0, %v573
      %575 = vdwg.mxu0
      %576 = vmatprep.subr.mxu0 0.0
      %577 = vmatpush1.msra.mxu0 0.0
      %578 = vmatprep.subr.mxu0 0.0
      %579 = vmatpush1.msra.mxu0 0.0
      %580 = vmatprep.subr.mxu0 0.0
      %581 = vmatpush1.msra.mxu0 0.0
      %582 = vmatprep.subr.mxu0 0.0
      %583 = vmatpush1.msra.mxu0 0.0
      %584 = vmatprep.subr.mxu0 0.0
      %585 = vmatpush1.msra.mxu0 0.0
      %586 = vmatprep.subr.mxu0 0.0
      %587 = vmatpush1.msra.mxu0 0.0
      %588 = vmatprep.subr.mxu0 0.0
      %589 = vmatpush1.msra.mxu0 0.0
      %590 = vmatprep.subr.mxu0 0.0
      %591 = vmatpush1.msra.mxu0 0.0
      %592 = vmatprep.subr.mxu0 0.0
      %593 = vmatpush1.msra.mxu0 0.0
      %594 = vmatprep.subr.mxu0 0.0
      %595 = vmatpush1.msra.mxu0 0.0
      %596 = vmatprep.subr.mxu0 0.0
      %597 = vmatpush1.msra.mxu0 0.0
      %598 = vmatprep.subr.mxu0 0.0
      %599 = vmatpush1.msra.mxu0 0.0
      %600 = vmatprep.subr.mxu0 0.0
      %601 = vmatpush1.msra.mxu0 0.0
      %602 = vmatprep.subr.mxu0 0.0
      %603 = vmatpush1.msra.mxu0 0.0
      %604 = vmatprep.subr.mxu0 0.0
      %605 = vmatpush1.msra.mxu0 0.0
      %606 = vmatprep.subr.mxu0 %v361
      %607 = vmatpush1.msra.mxu0 %v358
      %608 = vmatprep.subr.mxu0 0.0
      %609 = vmatpush2.msra.mxu0 0.0
      %610 = vmatprep.subr.mxu0 0.0
      %611 = vmatpush2.msra.mxu0 0.0
      %612 = vmatprep.subr.mxu0 0.0
      %613 = vmatpush2.msra.mxu0 0.0
      %614 = vmatprep.subr.mxu0 0.0
      %615 = vmatpush2.msra.mxu0 0.0
      %616 = vmatprep.subr.mxu0 0.0
      %617 = vmatpush2.msra.mxu0 0.0
      %618 = vmatprep.subr.mxu0 0.0
      %619 = vmatpush2.msra.mxu0 0.0
      %620 = vmatprep.subr.mxu0 0.0
      %621 = vmatpush2.msra.mxu0 0.0
      %622 = vmatprep.subr.mxu0 0.0
      %623 = vmatpush2.msra.mxu0 0.0
      %624 = vmatprep.subr.mxu0 0.0
      %625 = vmatpush2.msra.mxu0 0.0
      %626 = vmatprep.subr.mxu0 0.0
      %627 = vmatpush2.msra.mxu0 0.0
      %628 = vmatprep.subr.mxu0 0.0
      %629 = vmatpush2.msra.mxu0 0.0
      %630 = vmatprep.subr.mxu0 0.0
      %631 = vmatpush2.msra.mxu0 0.0
      %632 = vmatprep.subr.mxu0 0.0
      %633 = vmatpush2.msra.mxu0 0.0
      %634 = vmatprep.subr.mxu0 0.0
      %635 = vmatpush2.msra.mxu0 0.0
      %636 = vmatprep.subr.mxu0 0.0
      %637 = vmatpush2.msra.mxu0 0.0
      %638 = vmatprep.subr.mxu0 0.0
      %639 = vmatpush2.msra.mxu0 0.0
      %640 = vmatprep.mubr.f32.mxu0 0.0
      %641 = vmatmul.mubr.f32.gmra.mxu0 %v336
      %v642 = vpop.f32.mrf.mxu0
      %v643 = vadd.f32 0.0, %v642
      %v644 = vpop.f32.mrf.mxu0
      %v645 = vadd.f32 0.0, %v644
      %646 = vdwg.mxu0
      %vm663 = vcmask 1044480
      %v664 = vrot.slane %v308, 3
      %v665 = vrot.slane %v316, 3
      %v666 = vsel %vm663, %v664, %v665
      %v667 = vrot.slane %v309, 3
      %v668 = vrot.slane %v317, 3
      %v669 = vsel %vm663, %v667, %v668
      %v670 = vrot.slane %v310, 3
      %v671 = vrot.slane %v318, 3
      %v672 = vsel %vm663, %v670, %v671
      %v673 = vrot.slane %v311, 3
      %v674 = vrot.slane %v319, 3
      %v675 = vsel %vm663, %v673, %v674
      %v676 = vrot.slane %v312, 3
      %v677 = vrot.slane %v320, 3
      %v678 = vsel %vm663, %v676, %v677
      %v679 = vrot.slane %v313, 3
      %v680 = vrot.slane %v321, 3
      %v681 = vsel %vm663, %v679, %v680
      %v682 = vrot.slane %v314, 3
      %v683 = vrot.slane %v322, 3
      %v684 = vsel %vm663, %v682, %v683
      %v685 = vrot.slane %v315, 3
      %v686 = vrot.slane %v323, 3
      %v687 = vsel %vm663, %v685, %v686
      %v689 = vsel %vm334, %v332, 0
      %v691 = vsel %vm338, %v666, 0
      %v693 = vsel %vm338, %v669, 0
      %v695 = vsel %vm338, %v672, 0
      %v697 = vsel %vm338, %v675, 0
      %v699 = vsel %vm338, %v678, 0
      %v701 = vsel %vm338, %v681, 0
      %v703 = vsel %vm338, %v684, 0
      %v705 = vsel %vm338, %v687, 0
      %707 = vmatprep.subr.mxu0 0.0
      %708 = vmatpush1.msra.mxu0 0.0
      %709 = vmatprep.subr.mxu0 0.0
      %710 = vmatpush1.msra.mxu0 0.0
      %711 = vmatprep.subr.mxu0 0.0
      %712 = vmatpush1.msra.mxu0 0.0
      %713 = vmatprep.subr.mxu0 0.0
      %714 = vmatpush1.msra.mxu0 0.0
      %715 = vmatprep.subr.mxu0 0.0
      %716 = vmatpush1.msra.mxu0 0.0
      %717 = vmatprep.subr.mxu0 0.0
      %718 = vmatpush1.msra.mxu0 0.0
      %719 = vmatprep.subr.mxu0 0.0
      %720 = vmatpush1.msra.mxu0 0.0
      %721 = vmatprep.subr.mxu0 0.0
      %722 = vmatpush1.msra.mxu0 0.0
      %723 = vmatprep.subr.mxu0 0.0
      %724 = vmatpush1.msra.mxu0 0.0
      %725 = vmatprep.subr.mxu0 0.0
      %726 = vmatpush1.msra.mxu0 0.0
      %727 = vmatprep.subr.mxu0 0.0
      %728 = vmatpush1.msra.mxu0 0.0
      %729 = vmatprep.subr.mxu0 0.0
      %730 = vmatpush1.msra.mxu0 0.0
      %731 = vmatprep.subr.mxu0 0.0
      %732 = vmatpush1.msra.mxu0 0.0
      %733 = vmatprep.subr.mxu0 0.0
      %734 = vmatpush1.msra.mxu0 0.0
      %735 = vmatprep.subr.mxu0 0.0
      %736 = vmatpush1.msra.mxu0 0.0
      %737 = vmatprep.subr.mxu0 %v693
      %738 = vmatpush1.msra.mxu0 %v691
      %739 = vmatprep.subr.mxu0 0.0
      %740 = vmatpush2.msra.mxu0 0.0
      %741 = vmatprep.subr.mxu0 0.0
      %742 = vmatpush2.msra.mxu0 0.0
      %743 = vmatprep.subr.mxu0 0.0
      %744 = vmatpush2.msra.mxu0 0.0
      %745 = vmatprep.subr.mxu0 0.0
      %746 = vmatpush2.msra.mxu0 0.0
      %747 = vmatprep.subr.mxu0 0.0
      %748 = vmatpush2.msra.mxu0 0.0
      %749 = vmatprep.subr.mxu0 0.0
      %750 = vmatpush2.msra.mxu0 0.0
      %751 = vmatprep.subr.mxu0 0.0
      %752 = vmatpush2.msra.mxu0 0.0
      %753 = vmatprep.subr.mxu0 0.0
      %754 = vmatpush2.msra.mxu0 0.0
      %755 = vmatprep.subr.mxu0 0.0
      %756 = vmatpush2.msra.mxu0 0.0
      %757 = vmatprep.subr.mxu0 0.0
      %758 = vmatpush2.msra.mxu0 0.0
      %759 = vmatprep.subr.mxu0 0.0
      %760 = vmatpush2.msra.mxu0 0.0
      %761 = vmatprep.subr.mxu0 0.0
      %762 = vmatpush2.msra.mxu0 0.0
      %763 = vmatprep.subr.mxu0 0.0
      %764 = vmatpush2.msra.mxu0 0.0
      %765 = vmatprep.subr.mxu0 0.0
      %766 = vmatpush2.msra.mxu0 0.0
      %767 = vmatprep.subr.mxu0 0.0
      %768 = vmatpush2.msra.mxu0 0.0
      %769 = vmatprep.subr.mxu0 0.0
      %770 = vmatpush2.msra.mxu0 0.0
      %771 = vmatprep.mubr.f32.mxu0 0.0
      %772 = vmatmul.mubr.f32.gmra.mxu0 %v689
      %v773 = vpop.f32.mrf.mxu0
      %v774 = vadd.f32 %v430, %v773
      %v775 = vpop.f32.mrf.mxu0
      %v776 = vadd.f32 %v432, %v775
      %777 = vdwg.mxu0
      %778 = vmatprep.subr.mxu0 0.0
      %779 = vmatpush1.msra.mxu0 0.0
      %780 = vmatprep.subr.mxu0 0.0
      %781 = vmatpush1.msra.mxu0 0.0
      %782 = vmatprep.subr.mxu0 0.0
      %783 = vmatpush1.msra.mxu0 0.0
      %784 = vmatprep.subr.mxu0 0.0
      %785 = vmatpush1.msra.mxu0 0.0
      %786 = vmatprep.subr.mxu0 0.0
      %787 = vmatpush1.msra.mxu0 0.0
      %788 = vmatprep.subr.mxu0 0.0
      %789 = vmatpush1.msra.mxu0 0.0
      %790 = vmatprep.subr.mxu0 0.0
      %791 = vmatpush1.msra.mxu0 0.0
      %792 = vmatprep.subr.mxu0 0.0
      %793 = vmatpush1.msra.mxu0 0.0
      %794 = vmatprep.subr.mxu0 0.0
      %795 = vmatpush1.msra.mxu0 0.0
      %796 = vmatprep.subr.mxu0 0.0
      %797 = vmatpush1.msra.mxu0 0.0
      %798 = vmatprep.subr.mxu0 0.0
      %799 = vmatpush1.msra.mxu0 0.0
      %800 = vmatprep.subr.mxu0 0.0
      %801 = vmatpush1.msra.mxu0 0.0
      %802 = vmatprep.subr.mxu0 0.0
      %803 = vmatpush1.msra.mxu0 0.0
      %804 = vmatprep.subr.mxu0 0.0
      %805 = vmatpush1.msra.mxu0 0.0
      %806 = vmatprep.subr.mxu0 0.0
      %807 = vmatpush1.msra.mxu0 0.0
      %808 = vmatprep.subr.mxu0 %v697
      %809 = vmatpush1.msra.mxu0 %v695
      %810 = vmatprep.subr.mxu0 0.0
      %811 = vmatpush2.msra.mxu0 0.0
      %812 = vmatprep.subr.mxu0 0.0
      %813 = vmatpush2.msra.mxu0 0.0
      %814 = vmatprep.subr.mxu0 0.0
      %815 = vmatpush2.msra.mxu0 0.0
      %816 = vmatprep.subr.mxu0 0.0
      %817 = vmatpush2.msra.mxu0 0.0
      %818 = vmatprep.subr.mxu0 0.0
      %819 = vmatpush2.msra.mxu0 0.0
      %820 = vmatprep.subr.mxu0 0.0
      %821 = vmatpush2.msra.mxu0 0.0
      %822 = vmatprep.subr.mxu0 0.0
      %823 = vmatpush2.msra.mxu0 0.0
      %824 = vmatprep.subr.mxu0 0.0
      %825 = vmatpush2.msra.mxu0 0.0
      %826 = vmatprep.subr.mxu0 0.0
      %827 = vmatpush2.msra.mxu0 0.0
      %828 = vmatprep.subr.mxu0 0.0
      %829 = vmatpush2.msra.mxu0 0.0
      %830 = vmatprep.subr.mxu0 0.0
      %831 = vmatpush2.msra.mxu0 0.0
      %832 = vmatprep.subr.mxu0 0.0
      %833 = vmatpush2.msra.mxu0 0.0
      %834 = vmatprep.subr.mxu0 0.0
      %835 = vmatpush2.msra.mxu0 0.0
      %836 = vmatprep.subr.mxu0 0.0
      %837 = vmatpush2.msra.mxu0 0.0
      %838 = vmatprep.subr.mxu0 0.0
      %839 = vmatpush2.msra.mxu0 0.0
      %840 = vmatprep.subr.mxu0 0.0
      %841 = vmatpush2.msra.mxu0 0.0
      %842 = vmatprep.mubr.f32.mxu0 0.0
      %843 = vmatmul.mubr.f32.gmra.mxu0 %v689
      %v844 = vpop.f32.mrf.mxu0
      %v845 = vadd.f32 %v501, %v844
      %v846 = vpop.f32.mrf.mxu0
      %v847 = vadd.f32 %v503, %v846
      %848 = vdwg.mxu0
      %849 = vmatprep.subr.mxu0 0.0
      %850 = vmatpush1.msra.mxu0 0.0
      %851 = vmatprep.subr.mxu0 0.0
      %852 = vmatpush1.msra.mxu0 0.0
      %853 = vmatprep.subr.mxu0 0.0
      %854 = vmatpush1.msra.mxu0 0.0
      %855 = vmatprep.subr.mxu0 0.0
      %856 = vmatpush1.msra.mxu0 0.0
      %857 = vmatprep.subr.mxu0 0.0
      %858 = vmatpush1.msra.mxu0 0.0
      %859 = vmatprep.subr.mxu0 0.0
      %860 = vmatpush1.msra.mxu0 0.0
      %861 = vmatprep.subr.mxu0 0.0
      %862 = vmatpush1.msra.mxu0 0.0
      %863 = vmatprep.subr.mxu0 0.0
      %864 = vmatpush1.msra.mxu0 0.0
      %865 = vmatprep.subr.mxu0 0.0
      %866 = vmatpush1.msra.mxu0 0.0
      %867 = vmatprep.subr.mxu0 0.0
      %868 = vmatpush1.msra.mxu0 0.0
      %869 = vmatprep.subr.mxu0 0.0
      %870 = vmatpush1.msra.mxu0 0.0
      %871 = vmatprep.subr.mxu0 0.0
      %872 = vmatpush1.msra.mxu0 0.0
      %873 = vmatprep.subr.mxu0 0.0
      %874 = vmatpush1.msra.mxu0 0.0
      %875 = vmatprep.subr.mxu0 0.0
      %876 = vmatpush1.msra.mxu0 0.0
      %877 = vmatprep.subr.mxu0 0.0
      %878 = vmatpush1.msra.mxu0 0.0
      %879 = vmatprep.subr.mxu0 %v701
      %880 = vmatpush1.msra.mxu0 %v699
      %881 = vmatprep.subr.mxu0 0.0
      %882 = vmatpush2.msra.mxu0 0.0
      %883 = vmatprep.subr.mxu0 0.0
      %884 = vmatpush2.msra.mxu0 0.0
      %885 = vmatprep.subr.mxu0 0.0
      %886 = vmatpush2.msra.mxu0 0.0
      %887 = vmatprep.subr.mxu0 0.0
      %888 = vmatpush2.msra.mxu0 0.0
      %889 = vmatprep.subr.mxu0 0.0
      %890 = vmatpush2.msra.mxu0 0.0
      %891 = vmatprep.subr.mxu0 0.0
      %892 = vmatpush2.msra.mxu0 0.0
      %893 = vmatprep.subr.mxu0 0.0
      %894 = vmatpush2.msra.mxu0 0.0
      %895 = vmatprep.subr.mxu0 0.0
      %896 = vmatpush2.msra.mxu0 0.0
      %897 = vmatprep.subr.mxu0 0.0
      %898 = vmatpush2.msra.mxu0 0.0
      %899 = vmatprep.subr.mxu0 0.0
      %900 = vmatpush2.msra.mxu0 0.0
      %901 = vmatprep.subr.mxu0 0.0
      %902 = vmatpush2.msra.mxu0 0.0
      %903 = vmatprep.subr.mxu0 0.0
      %904 = vmatpush2.msra.mxu0 0.0
      %905 = vmatprep.subr.mxu0 0.0
      %906 = vmatpush2.msra.mxu0 0.0
      %907 = vmatprep.subr.mxu0 0.0
      %908 = vmatpush2.msra.mxu0 0.0
      %909 = vmatprep.subr.mxu0 0.0
      %910 = vmatpush2.msra.mxu0 0.0
      %911 = vmatprep.subr.mxu0 0.0
      %912 = vmatpush2.msra.mxu0 0.0
      %913 = vmatprep.mubr.f32.mxu0 0.0
      %914 = vmatmul.mubr.f32.gmra.mxu0 %v689
      %v915 = vpop.f32.mrf.mxu0
      %v916 = vadd.f32 %v572, %v915
      %v917 = vpop.f32.mrf.mxu0
      %v918 = vadd.f32 %v574, %v917
      %919 = vdwg.mxu0
      %920 = vmatprep.subr.mxu0 0.0
      %921 = vmatpush1.msra.mxu0 0.0
      %922 = vmatprep.subr.mxu0 0.0
      %923 = vmatpush1.msra.mxu0 0.0
      %924 = vmatprep.subr.mxu0 0.0
      %925 = vmatpush1.msra.mxu0 0.0
      %926 = vmatprep.subr.mxu0 0.0
      %927 = vmatpush1.msra.mxu0 0.0
      %928 = vmatprep.subr.mxu0 0.0
      %929 = vmatpush1.msra.mxu0 0.0
      %930 = vmatprep.subr.mxu0 0.0
      %931 = vmatpush1.msra.mxu0 0.0
      %932 = vmatprep.subr.mxu0 0.0
      %933 = vmatpush1.msra.mxu0 0.0
      %934 = vmatprep.subr.mxu0 0.0
      %935 = vmatpush1.msra.mxu0 0.0
      %936 = vmatprep.subr.mxu0 0.0
      %937 = vmatpush1.msra.mxu0 0.0
      %938 = vmatprep.subr.mxu0 0.0
      %939 = vmatpush1.msra.mxu0 0.0
      %940 = vmatprep.subr.mxu0 0.0
      %941 = vmatpush1.msra.mxu0 0.0
      %942 = vmatprep.subr.mxu0 0.0
      %943 = vmatpush1.msra.mxu0 0.0
      %944 = vmatprep.subr.mxu0 0.0
      %945 = vmatpush1.msra.mxu0 0.0
      %946 = vmatprep.subr.mxu0 0.0
      %947 = vmatpush1.msra.mxu0 0.0
      %948 = vmatprep.subr.mxu0 0.0
      %949 = vmatpush1.msra.mxu0 0.0
      %950 = vmatprep.subr.mxu0 %v705
      %951 = vmatpush1.msra.mxu0 %v703
      %952 = vmatprep.subr.mxu0 0.0
      %953 = vmatpush2.msra.mxu0 0.0
      %954 = vmatprep.subr.mxu0 0.0
      %955 = vmatpush2.msra.mxu0 0.0
      %956 = vmatprep.subr.mxu0 0.0
      %957 = vmatpush2.msra.mxu0 0.0
      %958 = vmatprep.subr.mxu0 0.0
      %959 = vmatpush2.msra.mxu0 0.0
      %960 = vmatprep.subr.mxu0 0.0
      %961 = vmatpush2.msra.mxu0 0.0
      %962 = vmatprep.subr.mxu0 0.0
      %963 = vmatpush2.msra.mxu0 0.0
      %964 = vmatprep.subr.mxu0 0.0
      %965 = vmatpush2.msra.mxu0 0.0
      %966 = vmatprep.subr.mxu0 0.0
      %967 = vmatpush2.msra.mxu0 0.0
      %968 = vmatprep.subr.mxu0 0.0
      %969 = vmatpush2.msra.mxu0 0.0
      %970 = vmatprep.subr.mxu0 0.0
      %971 = vmatpush2.msra.mxu0 0.0
      %972 = vmatprep.subr.mxu0 0.0
      %973 = vmatpush2.msra.mxu0 0.0
      %974 = vmatprep.subr.mxu0 0.0
      %975 = vmatpush2.msra.mxu0 0.0
      %976 = vmatprep.subr.mxu0 0.0
      %977 = vmatpush2.msra.mxu0 0.0
      %978 = vmatprep.subr.mxu0 0.0
      %979 = vmatpush2.msra.mxu0 0.0
      %980 = vmatprep.subr.mxu0 0.0
      %981 = vmatpush2.msra.mxu0 0.0
      %982 = vmatprep.subr.mxu0 0.0
      %983 = vmatpush2.msra.mxu0 0.0
      %984 = vmatprep.mubr.f32.mxu0 0.0
      %985 = vmatmul.mubr.f32.gmra.mxu0 %v689
      %v986 = vpop.f32.mrf.mxu0
      %v987 = vadd.f32 %v643, %v986
      %v988 = vpop.f32.mrf.mxu0
      %v989 = vadd.f32 %v645, %v988
      %990 = vdwg.mxu0
      %v991 = vmax.f32 %v774, 0.0
      %v992 = vmax.f32 %v776, 0.0
      %v993 = vmax.f32 %v845, 0.0
      %v994 = vmax.f32 %v847, 0.0
      %v995 = vmax.f32 %v916, 0.0
      %v996 = vmax.f32 %v918, 0.0
      %v997 = vmax.f32 %v987, 0.0
      %v998 = vmax.f32 %v989, 0.0
      %v999 = vld [vmem:[%s4] sm:$0x7]
      %v1001 = vsel %vm334, %v999, 0
      %v1004 = vsel %vm338, %v991, 0
      %v1007 = vsel %vm338, %v992, 0
      %v1010 = vsel %vm338, %v993, 0
      %v1013 = vsel %vm338, %v994, 0
      %v1016 = vsel %vm338, %v995, 0
      %v1019 = vsel %vm338, %v996, 0
      %v1022 = vsel %vm338, %v997, 0
      %v1025 = vsel %vm338, %v998, 0
      %1027 = vmatprep.subr.mxu0 0.0
      %1028 = vmatpush1.msra.mxu0 0.0
      %1029 = vmatprep.subr.mxu0 0.0
      %1030 = vmatpush1.msra.mxu0 0.0
      %1031 = vmatprep.subr.mxu0 0.0
      %1032 = vmatpush1.msra.mxu0 0.0
      %1033 = vmatprep.subr.mxu0 0.0
      %1034 = vmatpush1.msra.mxu0 0.0
      %1035 = vmatprep.subr.mxu0 0.0
      %1036 = vmatpush1.msra.mxu0 0.0
      %1037 = vmatprep.subr.mxu0 0.0
      %1038 = vmatpush1.msra.mxu0 0.0
      %1039 = vmatprep.subr.mxu0 0.0
      %1040 = vmatpush1.msra.mxu0 0.0
      %1041 = vmatprep.subr.mxu0 0.0
      %1042 = vmatpush1.msra.mxu0 0.0
      %1043 = vmatprep.subr.mxu0 0.0
      %1044 = vmatpush1.msra.mxu0 0.0
      %1045 = vmatprep.subr.mxu0 0.0
      %1046 = vmatpush1.msra.mxu0 0.0
      %1047 = vmatprep.subr.mxu0 0.0
      %1048 = vmatpush1.msra.mxu0 0.0
      %1049 = vmatprep.subr.mxu0 0.0
      %1050 = vmatpush1.msra.mxu0 0.0
      %1051 = vmatprep.subr.mxu0 0.0
      %1052 = vmatpush1.msra.mxu0 0.0
      %1053 = vmatprep.subr.mxu0 0.0
      %1054 = vmatpush1.msra.mxu0 0.0
      %1055 = vmatprep.subr.mxu0 0.0
      %1056 = vmatpush1.msra.mxu0 0.0
      %1057 = vmatprep.subr.mxu0 %v1007
      %1058 = vmatpush1.msra.mxu0 %v1004
      %1059 = vmatprep.subr.mxu0 0.0
      %1060 = vmatpush2.msra.mxu0 0.0
      %1061 = vmatprep.subr.mxu0 0.0
      %1062 = vmatpush2.msra.mxu0 0.0
      %1063 = vmatprep.subr.mxu0 0.0
      %1064 = vmatpush2.msra.mxu0 0.0
      %1065 = vmatprep.subr.mxu0 0.0
      %1066 = vmatpush2.msra.mxu0 0.0
      %1067 = vmatprep.subr.mxu0 0.0
      %1068 = vmatpush2.msra.mxu0 0.0
      %1069 = vmatprep.subr.mxu0 0.0
      %1070 = vmatpush2.msra.mxu0 0.0
      %1071 = vmatprep.subr.mxu0 0.0
      %1072 = vmatpush2.msra.mxu0 0.0
      %1073 = vmatprep.subr.mxu0 0.0
      %1074 = vmatpush2.msra.mxu0 0.0
      %1075 = vmatprep.subr.mxu0 0.0
      %1076 = vmatpush2.msra.mxu0 0.0
      %1077 = vmatprep.subr.mxu0 0.0
      %1078 = vmatpush2.msra.mxu0 0.0
      %1079 = vmatprep.subr.mxu0 0.0
      %1080 = vmatpush2.msra.mxu0 0.0
      %1081 = vmatprep.subr.mxu0 0.0
      %1082 = vmatpush2.msra.mxu0 0.0
      %1083 = vmatprep.subr.mxu0 0.0
      %1084 = vmatpush2.msra.mxu0 0.0
      %1085 = vmatprep.subr.mxu0 0.0
      %1086 = vmatpush2.msra.mxu0 0.0
      %1087 = vmatprep.subr.mxu0 0.0
      %1088 = vmatpush2.msra.mxu0 0.0
      %1089 = vmatprep.subr.mxu0 0.0
      %1090 = vmatpush2.msra.mxu0 0.0
      %1091 = vmatprep.mubr.f32.mxu0 0.0
      %1092 = vmatmul.mubr.f32.gmra.mxu0 %v1001
      %v1093 = vpop.f32.mrf.mxu0
      %v1094 = vadd.f32 0.0, %v1093
      %v1095 = vpop.f32.mrf.mxu0
      %v1096 = vadd.f32 0.0, %v1095
      %1097 = vdwg.mxu0
      %1098 = vmatprep.subr.mxu0 0.0
      %1099 = vmatpush1.msra.mxu0 0.0
      %1100 = vmatprep.subr.mxu0 0.0
      %1101 = vmatpush1.msra.mxu0 0.0
      %1102 = vmatprep.subr.mxu0 0.0
      %1103 = vmatpush1.msra.mxu0 0.0
      %1104 = vmatprep.subr.mxu0 0.0
      %1105 = vmatpush1.msra.mxu0 0.0
      %1106 = vmatprep.subr.mxu0 0.0
      %1107 = vmatpush1.msra.mxu0 0.0
      %1108 = vmatprep.subr.mxu0 0.0
      %1109 = vmatpush1.msra.mxu0 0.0
      %1110 = vmatprep.subr.mxu0 0.0
      %1111 = vmatpush1.msra.mxu0 0.0
      %1112 = vmatprep.subr.mxu0 0.0
      %1113 = vmatpush1.msra.mxu0 0.0
      %1114 = vmatprep.subr.mxu0 0.0
      %1115 = vmatpush1.msra.mxu0 0.0
      %1116 = vmatprep.subr.mxu0 0.0
      %1117 = vmatpush1.msra.mxu0 0.0
      %1118 = vmatprep.subr.mxu0 0.0
      %1119 = vmatpush1.msra.mxu0 0.0
      %1120 = vmatprep.subr.mxu0 0.0
      %1121 = vmatpush1.msra.mxu0 0.0
      %1122 = vmatprep.subr.mxu0 0.0
      %1123 = vmatpush1.msra.mxu0 0.0
      %1124 = vmatprep.subr.mxu0 0.0
      %1125 = vmatpush1.msra.mxu0 0.0
      %1126 = vmatprep.subr.mxu0 0.0
      %1127 = vmatpush1.msra.mxu0 0.0
      %1128 = vmatprep.subr.mxu0 %v1013
      %1129 = vmatpush1.msra.mxu0 %v1010
      %1130 = vmatprep.subr.mxu0 0.0
      %1131 = vmatpush2.msra.mxu0 0.0
      %1132 = vmatprep.subr.mxu0 0.0
      %1133 = vmatpush2.msra.mxu0 0.0
      %1134 = vmatprep.subr.mxu0 0.0
      %1135 = vmatpush2.msra.mxu0 0.0
      %1136 = vmatprep.subr.mxu0 0.0
      %1137 = vmatpush2.msra.mxu0 0.0
      %1138 = vmatprep.subr.mxu0 0.0
      %1139 = vmatpush2.msra.mxu0 0.0
      %1140 = vmatprep.subr.mxu0 0.0
      %1141 = vmatpush2.msra.mxu0 0.0
      %1142 = vmatprep.subr.mxu0 0.0
      %1143 = vmatpush2.msra.mxu0 0.0
      %1144 = vmatprep.subr.mxu0 0.0
      %1145 = vmatpush2.msra.mxu0 0.0
      %1146 = vmatprep.subr.mxu0 0.0
      %1147 = vmatpush2.msra.mxu0 0.0
      %1148 = vmatprep.subr.mxu0 0.0
      %1149 = vmatpush2.msra.mxu0 0.0
      %1150 = vmatprep.subr.mxu0 0.0
      %1151 = vmatpush2.msra.mxu0 0.0
      %1152 = vmatprep.subr.mxu0 0.0
      %1153 = vmatpush2.msra.mxu0 0.0
      %1154 = vmatprep.subr.mxu0 0.0
      %1155 = vmatpush2.msra.mxu0 0.0
      %1156 = vmatprep.subr.mxu0 0.0
      %1157 = vmatpush2.msra.mxu0 0.0
      %1158 = vmatprep.subr.mxu0 0.0
      %1159 = vmatpush2.msra.mxu0 0.0
      %1160 = vmatprep.subr.mxu0 0.0
      %1161 = vmatpush2.msra.mxu0 0.0
      %1162 = vmatprep.mubr.f32.mxu0 0.0
      %1163 = vmatmul.mubr.f32.gmra.mxu0 %v1001
      %v1164 = vpop.f32.mrf.mxu0
      %v1165 = vadd.f32 0.0, %v1164
      %v1166 = vpop.f32.mrf.mxu0
      %v1167 = vadd.f32 0.0, %v1166
      %1168 = vdwg.mxu0
      %1169 = vmatprep.subr.mxu0 0.0
      %1170 = vmatpush1.msra.mxu0 0.0
      %1171 = vmatprep.subr.mxu0 0.0
      %1172 = vmatpush1.msra.mxu0 0.0
      %1173 = vmatprep.subr.mxu0 0.0
      %1174 = vmatpush1.msra.mxu0 0.0
      %1175 = vmatprep.subr.mxu0 0.0
      %1176 = vmatpush1.msra.mxu0 0.0
      %1177 = vmatprep.subr.mxu0 0.0
      %1178 = vmatpush1.msra.mxu0 0.0
      %1179 = vmatprep.subr.mxu0 0.0
      %1180 = vmatpush1.msra.mxu0 0.0
      %1181 = vmatprep.subr.mxu0 0.0
      %1182 = vmatpush1.msra.mxu0 0.0
      %1183 = vmatprep.subr.mxu0 0.0
      %1184 = vmatpush1.msra.mxu0 0.0
      %1185 = vmatprep.subr.mxu0 0.0
      %1186 = vmatpush1.msra.mxu0 0.0
      %1187 = vmatprep.subr.mxu0 0.0
      %1188 = vmatpush1.msra.mxu0 0.0
      %1189 = vmatprep.subr.mxu0 0.0
      %1190 = vmatpush1.msra.mxu0 0.0
      %1191 = vmatprep.subr.mxu0 0.0
      %1192 = vmatpush1.msra.mxu0 0.0
      %1193 = vmatprep.subr.mxu0 0.0
      %1194 = vmatpush1.msra.mxu0 0.0
      %1195 = vmatprep.subr.mxu0 0.0
      %1196 = vmatpush1.msra.mxu0 0.0
      %1197 = vmatprep.subr.mxu0 0.0
      %1198 = vmatpush1.msra.mxu0 0.0
      %1199 = vmatprep.subr.mxu0 %v1019
      %1200 = vmatpush1.msra.mxu0 %v1016
      %1201 = vmatprep.subr.mxu0 0.0
      %1202 = vmatpush2.msra.mxu0 0.0
      %1203 = vmatprep.subr.mxu0 0.0
      %1204 = vmatpush2.msra.mxu0 0.0
      %1205 = vmatprep.subr.mxu0 0.0
      %1206 = vmatpush2.msra.mxu0 0.0
      %1207 = vmatprep.subr.mxu0 0.0
      %1208 = vmatpush2.msra.mxu0 0.0
      %1209 = vmatprep.subr.mxu0 0.0
      %1210 = vmatpush2.msra.mxu0 0.0
      %1211 = vmatprep.subr.mxu0 0.0
      %1212 = vmatpush2.msra.mxu0 0.0
      %1213 = vmatprep.subr.mxu0 0.0
      %1214 = vmatpush2.msra.mxu0 0.0
      %1215 = vmatprep.subr.mxu0 0.0
      %1216 = vmatpush2.msra.mxu0 0.0
      %1217 = vmatprep.subr.mxu0 0.0
      %1218 = vmatpush2.msra.mxu0 0.0
      %1219 = vmatprep.subr.mxu0 0.0
      %1220 = vmatpush2.msra.mxu0 0.0
      %1221 = vmatprep.subr.mxu0 0.0
      %1222 = vmatpush2.msra.mxu0 0.0
      %1223 = vmatprep.subr.mxu0 0.0
      %1224 = vmatpush2.msra.mxu0 0.0
      %1225 = vmatprep.subr.mxu0 0.0
      %1226 = vmatpush2.msra.mxu0 0.0
      %1227 = vmatprep.subr.mxu0 0.0
      %1228 = vmatpush2.msra.mxu0 0.0
      %1229 = vmatprep.subr.mxu0 0.0
      %1230 = vmatpush2.msra.mxu0 0.0
      %1231 = vmatprep.subr.mxu0 0.0
      %1232 = vmatpush2.msra.mxu0 0.0
      %1233 = vmatprep.mubr.f32.mxu0 0.0
      %1234 = vmatmul.mubr.f32.gmra.mxu0 %v1001
      %v1235 = vpop.f32.mrf.mxu0
      %v1236 = vadd.f32 0.0, %v1235
      %v1237 = vpop.f32.mrf.mxu0
      %v1238 = vadd.f32 0.0, %v1237
      %1239 = vdwg.mxu0
      %1240 = vmatprep.subr.mxu0 0.0
      %1241 = vmatpush1.msra.mxu0 0.0
      %1242 = vmatprep.subr.mxu0 0.0
      %1243 = vmatpush1.msra.mxu0 0.0
      %1244 = vmatprep.subr.mxu0 0.0
      %1245 = vmatpush1.msra.mxu0 0.0
      %1246 = vmatprep.subr.mxu0 0.0
      %1247 = vmatpush1.msra.mxu0 0.0
      %1248 = vmatprep.subr.mxu0 0.0
      %1249 = vmatpush1.msra.mxu0 0.0
      %1250 = vmatprep.subr.mxu0 0.0
      %1251 = vmatpush1.msra.mxu0 0.0
      %1252 = vmatprep.subr.mxu0 0.0
      %1253 = vmatpush1.msra.mxu0 0.0
      %1254 = vmatprep.subr.mxu0 0.0
      %1255 = vmatpush1.msra.mxu0 0.0
      %1256 = vmatprep.subr.mxu0 0.0
      %1257 = vmatpush1.msra.mxu0 0.0
      %1258 = vmatprep.subr.mxu0 0.0
      %1259 = vmatpush1.msra.mxu0 0.0
      %1260 = vmatprep.subr.mxu0 0.0
      %1261 = vmatpush1.msra.mxu0 0.0
      %1262 = vmatprep.subr.mxu0 0.0
      %1263 = vmatpush1.msra.mxu0 0.0
      %1264 = vmatprep.subr.mxu0 0.0
      %1265 = vmatpush1.msra.mxu0 0.0
      %1266 = vmatprep.subr.mxu0 0.0
      %1267 = vmatpush1.msra.mxu0 0.0
      %1268 = vmatprep.subr.mxu0 0.0
      %1269 = vmatpush1.msra.mxu0 0.0
      %1270 = vmatprep.subr.mxu0 %v1025
      %1271 = vmatpush1.msra.mxu0 %v1022
      %1272 = vmatprep.subr.mxu0 0.0
      %1273 = vmatpush2.msra.mxu0 0.0
      %1274 = vmatprep.subr.mxu0 0.0
      %1275 = vmatpush2.msra.mxu0 0.0
      %1276 = vmatprep.subr.mxu0 0.0
      %1277 = vmatpush2.msra.mxu0 0.0
      %1278 = vmatprep.subr.mxu0 0.0
      %1279 = vmatpush2.msra.mxu0 0.0
      %1280 = vmatprep.subr.mxu0 0.0
      %1281 = vmatpush2.msra.mxu0 0.0
      %1282 = vmatprep.subr.mxu0 0.0
      %1283 = vmatpush2.msra.mxu0 0.0
      %1284 = vmatprep.subr.mxu0 0.0
      %1285 = vmatpush2.msra.mxu0 0.0
      %1286 = vmatprep.subr.mxu0 0.0
      %1287 = vmatpush2.msra.mxu0 0.0
      %1288 = vmatprep.subr.mxu0 0.0
      %1289 = vmatpush2.msra.mxu0 0.0
      %1290 = vmatprep.subr.mxu0 0.0
      %1291 = vmatpush2.msra.mxu0 0.0
      %1292 = vmatprep.subr.mxu0 0.0
      %1293 = vmatpush2.msra.mxu0 0.0
      %1294 = vmatprep.subr.mxu0 0.0
      %1295 = vmatpush2.msra.mxu0 0.0
      %1296 = vmatprep.subr.mxu0 0.0
      %1297 = vmatpush2.msra.mxu0 0.0
      %1298 = vmatprep.subr.mxu0 0.0
      %1299 = vmatpush2.msra.mxu0 0.0
      %1300 = vmatprep.subr.mxu0 0.0
      %1301 = vmatpush2.msra.mxu0 0.0
      %1302 = vmatprep.subr.mxu0 0.0
      %1303 = vmatpush2.msra.mxu0 0.0
      %1304 = vmatprep.mubr.f32.mxu0 0.0
      %1305 = vmatmul.mubr.f32.gmra.mxu0 %v1001
      %v1306 = vpop.f32.mrf.mxu0
      %v1307 = vadd.f32 0.0, %v1306
      %v1308 = vpop.f32.mrf.mxu0
      %v1309 = vadd.f32 0.0, %v1308
      %1310 = vdwg.mxu0
      %v1311 = vadd.f32 %v300, %v1094
      %v1312 = vadd.f32 %v301, %v1096
      %v1313 = vadd.f32 %v302, %v1165
      %v1314 = vadd.f32 %v303, %v1167
      %v1315 = vadd.f32 %v304, %v1236
      %v1316 = vadd.f32 %v305, %v1238
      %v1317 = vadd.f32 %v306, %v1307
      %v1318 = vadd.f32 %v307, %v1309
      %v1319 = vmax.f32 %v1311, 0.0
      %v1320 = vmax.f32 %v1312, 0.0
      %v1321 = vmax.f32 %v1313, 0.0
      %v1322 = vmax.f32 %v1314, 0.0
      %v1323 = vmax.f32 %v1315, 0.0
      %v1324 = vmax.f32 %v1316, 0.0
      %v1325 = vmax.f32 %v1317, 0.0
      %v1326 = vmax.f32 %v1318, 0.0
      %v1327 = vmin.f32 %v1319, 1.0
      %v1328 = vmin.f32 %v1320, 1.0
      %v1329 = vmin.f32 %v1321, 1.0
      %v1330 = vmin.f32 %v1322, 1.0
      %v1331 = vmin.f32 %v1323, 1.0
      %v1332 = vmin.f32 %v1324, 1.0
      %v1333 = vmin.f32 %v1325, 1.0
      %v1334 = vmin.f32 %v1326, 1.0
      %v1343 = vcombine.low %v1327, %v1328
      %v1344 = vcombine.low %v1329, %v1330
      %v1345 = vcombine.low %v1331, %v1332
      %v1346 = vcombine.low %v1333, %v1334
      %1351 = vst [vmem:[%s298] sm:$0x77] %v1343
      %1352 = vst [vmem:[%s298 + $0x8] sm:$0x77] %v1344
      %1353 = vst [vmem:[%s298 + $0x10] sm:$0x77] %v1345
      %1354 = vst [vmem:[%s298 + $0x18] sm:$0x77] %v1346
      %s1355 = smul.u32 8, %s21
      %p1356 = scmp.lt.s32.totalorder %s20, 1
      %s1357 = scalar_select %p1356, %s20, 1
      %p1358 = scmp.lt.s32.totalorder %s1355, 7
      %s1359 = scalar_select %p1358, %s1355, 7
      %s1360 = smul.addr %s1357, 8
      %s1361 = sadd.s32 %s1359, %s1360
      %s1362 = smul.addr %s1361, 4
      %s1363 = scalar_lea.vmem %s5, %s1362
      // Predicated region
      $region41: #{tpu_custom_call.1} parent=39 // pred_check
        %p1364 = pneg %p167
      $region42: #{tpu_custom_call.1} parent=39 // pred_check_branch
        %1366 = sbr.rel (%p1364) target = $region44
      $region43: #{tpu_custom_call.1} parent=39 // pred_region
        %s1367 = smul.u32 8, %s21
      $region44: #{tpu_custom_call.1} parent=39 // pred_fallthru
        _
    $region40: #{tpu_custom_call.1} parent=5 // pred_fallthru
      _
    %p1368 = scmp.le.s32.totalorder 2, %s11
    // Predicated region
    $region45: #{tpu_custom_call.1} parent=5 // pred_check
      %p1369 = pneg %p1368
    $region46: #{tpu_custom_call.1} parent=5 // pred_check_branch
      %1371 = sbr.rel (%p1369) target = $region48
    $region47: #{tpu_custom_call.1} parent=5 // pred_region
      %s1372 = ssub.s32 %s11, 2
      // Predicated region
      $region49: #{tpu_custom_call.1} parent=47 // pred_check
        %p1373 = pneg %p173
      $region50: #{tpu_custom_call.1} parent=47 // pred_check_branch
        %1375 = sbr.rel (%p1373) target = $region52
      $region51: #{tpu_custom_call.1} parent=47 // pred_region
        %s1376 = smul.u32 8, %s23
        %p1377 = scmp.lt.s32.totalorder %s22, 1
        %s1378 = scalar_select %p1377, %s22, 1
        %p1379 = scmp.lt.s32.totalorder %s1376, 7
        %s1380 = scalar_select %p1379, %s1376, 7
        %s1381 = smul.addr %s1378, 8
        %s1382 = sadd.s32 %s1380, %s1381
        %s1383 = smul.addr %s1382, 4
        %s1384 = scalar_lea.vmem %s5, %s1383
      $region52: #{tpu_custom_call.1} parent=47 // pred_fallthru
        _
    $region48: #{tpu_custom_call.1} parent=5 // pred_fallthru
      _
  $region6: #{tpu_custom_call.1} parent=0 // loop_footer
    %s15 = sadd.s32 1, %s11
  $region7: #{tpu_custom_call.1} parent=0 // loop_footer_branch
    %10 = sbr.rel target = $region3
  $region8: #{tpu_custom_call.1} parent=0 // loop_exit
    _

</llo_original>
